<compile_context>
chip_gen: v7x
topology: tpu7x:2x2x1
jax: 0.10.0
libtpu: 0.0.40
codegen_flags: <defaults>
</compile_context>

<pallas_src>
import jax
import jax.numpy as jnp
from jax.experimental import pallas as pl
from jax.experimental.pallas import tpu as pltpu


def _round_up(x: int, m: int) -> int:
    return ((x + m - 1) // m) * m


def _largest_aligned_divisor(dim: int, align: int, cap: int) -> int:
    """Largest multiple of `align` that divides `dim` and is <= cap.

    Assumes dim % align == 0. Cheap loop: at most cap/align iterations.
    """
    best = align
    t = align
    limit = min(dim, cap)
    while t <= limit:
        if dim % t == 0:
            best = t
        t += align
    return best


# ---------------------------------------------------------------------------
# Kernels
# ---------------------------------------------------------------------------
def _fc_kernel_single_k(x_ref, w_ref, o_ref):
    """Fast path: the whole K dim fits in one block -> write output directly.

    x_ref: (tm, K)   activations (bf16)
    w_ref: (tn, K)   weight in PyTorch (out, in) layout
    o_ref: (tm, tn)  f32 output tile
    """
    o_ref[...] = jax.lax.dot_general(
        x_ref[...],
        w_ref[...],
        dimension_numbers=(((1,), (1,)), ((), ())),  # y = x @ W^T, no transpose
        preferred_element_type=jnp.float32,
    ).astype(o_ref.dtype)


def _fc_kernel_multi_k(x_ref, w_ref, o_ref, acc_ref):
    """K-tiled path: f32 accumulator resident across the K grid axis.

    x_ref: (tm, tk), w_ref: (tn, tk), o_ref/acc_ref: (tm, tn).
    """
    k = pl.program_id(2)

    @pl.when(k == 0)
    def _():
        acc_ref[...] = jnp.zeros_like(acc_ref)

    acc_ref[...] += jax.lax.dot_general(
        x_ref[...],
        w_ref[...],
        dimension_numbers=(((1,), (1,)), ((), ())),
        preferred_element_type=jnp.float32,
    )

    @pl.when(k == pl.num_programs(2) - 1)
    def _():
        o_ref[...] = acc_ref[...].astype(o_ref.dtype)


# ---------------------------------------------------------------------------
# Wrapper
# ---------------------------------------------------------------------------
def simple_fc_forward(
    x,
    weight,
    *,
    compute_dtype=jnp.bfloat16,
    tm_max: int = 256,
    tn_max: int = 512,
    tk_max: int = 2048,
    allow_xla_fallback: bool = False,
    xla_fallback_macs: int = 1 << 21,
):
    """Forward of SimpleFCNetwork: y = x @ weight^T (bias-free nn.Linear).

    x:      (B, input_size)               any float dtype
    weight: (output_size, input_size)     PyTorch nn.Linear layout
    returns (B, output_size)              float32

    Inputs are cast to `compute_dtype` (bf16 by default) at the kernel
    boundary; accumulation is always f32.  In real use keep the weight stored
    in bf16 so the cast is free.
    """
    B, K = x.shape
    N, Kw = weight.shape
    assert K == Kw, "weight input_size must match x"

    # Tiny-problem dispatch (off by default so the Pallas path is exercised).
    if allow_xla_fallback and (B * N * K) < xla_fallback_macs:
        return jax.lax.dot_general(
            x, weight, dimension_numbers=(((1,), (1,)), ((), ())),
            preferred_element_type=jnp.float32,
        ).astype(jnp.float32)

    # Cast to the compute dtype (no-op if already there).
    if compute_dtype is not None and x.dtype != compute_dtype:
        x = x.astype(compute_dtype)
    if compute_dtype is not None and weight.dtype != compute_dtype:
        weight = weight.astype(compute_dtype)
    itemsize = jnp.dtype(x.dtype).itemsize

    # ---- M (batch): pad only to a multiple of 8, tm divides the padded batch.
    Bp = _round_up(B, 8)
    tm = _largest_aligned_divisor(Bp, 8, tm_max)

    # ---- K (reduction): must be tiled exactly (garbage in the K tail would
    # corrupt the accumulation), so prefer divisors over padding.
    if K <= tk_max:
        tk, Kp = K, K                      # single full-K block (layout-legal)
    elif K % 128 == 0:
        tk, Kp = _largest_aligned_divisor(K, 128, tk_max), K
    else:
        # Rare ragged-K fallback: one pad copy keeps the reduction exact.
        # TODO(synk): mask the K tail in-kernel instead of padding the weight.
        Kp = _round_up(K, 128)
        tk = _largest_aligned_divisor(Kp, 128, tk_max)

    # ---- N (output features): lane dim of the output.
    if N <= 128:
        tn, Np = N, N                      # full-dim block, no pad (tiny store)
    elif N % 128 == 0:
        tn, Np = _largest_aligned_divisor(N, 128, tn_max), N
    else:
        # Ragged-N fallback: pad the weight once (pre-pad outside the hot path
        # in real use -- the weight is a reused parameter).
        Np = _round_up(N, 128)
        tn = _largest_aligned_divisor(Np, 128, tn_max)

    grid_m, grid_n, grid_k = Bp // tm, Np // tn, Kp // tk

    # v7x has 2 TensorCores: make sure at least one "parallel" axis has >=2
    # blocks so the kernel doesn't serialize on a single core.
    if grid_m == 1 and grid_n == 1 and tn % 256 == 0:
        tn //= 2
        grid_n = Np // tn

    # ---- Padding (x is tiny; weight only in the ragged fallback cases).
    x_p = x if (Bp == B and Kp == K) else jnp.pad(x, ((0, Bp - B), (0, Kp - K)))
    w_p = weight if (Np == N and Kp == K) else jnp.pad(
        weight, ((0, Np - N), (0, Kp - K)))

    # ---- VMEM budget: double-buffered x, 2-3 buffered weight, f32 acc + out.
    w_bufs = 3 if grid_k > 1 else 2
    working_set = (
        2 * tm * tk * itemsize            # x tiles (double-buffered)
        + w_bufs * tn * tk * itemsize     # weight tiles
        + (tm * tn * 4 if grid_k > 1 else 0)  # f32 accumulator scratch
        + 2 * tm * tn * 4                 # f32 output tiles (double-buffered)
    )
    # Generous headroom, but capped at 48 MiB so it is safe on v7x (64 MiB
    # physical) as well as v5e/v6e (128 MiB physical).
    vmem_limit = int(min(max(2 * working_set, 32 * 1024 * 1024),
                         48 * 1024 * 1024))

    def _weight_spec_multi_k():
        idx = lambda i, j, k: (j, k)
        if hasattr(pl, "Buffered"):
            try:
                # Deeper pipeline on the weight stream: per-step compute is
                # short at small batch, so keep the DMA engine saturated.
                return pl.BlockSpec((tn, tk), idx, pipeline_mode=pl.Buffered(3))
            except TypeError:
                pass
        return pl.BlockSpec((tn, tk), idx)

    if grid_k == 1:
        kernel = _fc_kernel_single_k
        grid = (grid_m, grid_n)
        in_specs = [
            pl.BlockSpec((tm, tk), lambda i, j: (i, 0)),   # x tile
            pl.BlockSpec((tn, tk), lambda i, j: (j, 0)),   # W tile (out, in)
        ]
        out_specs = pl.BlockSpec((tm, tn), lambda i, j: (i, j))
        scratch_shapes = []
        dim_sem = ("parallel", "parallel")
    else:
        kernel = _fc_kernel_multi_k
        grid = (grid_m, grid_n, grid_k)
        in_specs = [
            pl.BlockSpec((tm, tk), lambda i, j, k: (i, k)),  # x tile
            _weight_spec_multi_k(),                          # W tile (out, in)
        ]
        out_specs = pl.BlockSpec((tm, tn), lambda i, j, k: (i, j))
        scratch_shapes = [pltpu.VMEM((tm, tn), jnp.float32)]
        dim_sem = ("parallel", "parallel", "arbitrary")

    out_p = pl.pallas_call(
        kernel,
        out_shape=jax.ShapeDtypeStruct((Bp, Np), jnp.float32),
        grid_spec=pltpu.PrefetchScalarGridSpec(
            num_scalar_prefetch=0,
            grid=grid,
            in_specs=in_specs,
            out_specs=out_specs,
            scratch_shapes=scratch_shapes,
        ),
        compiler_params=pltpu.CompilerParams(
            dimension_semantics=dim_sem,
            vmem_limit_bytes=vmem_limit,
        ),
    )(x_p, w_p)

    if Bp == B and Np == N:
        return out_p
    return out_p[:B, :N]


# ---------------------------------------------------------------------------
# Demo / self-test
# ---------------------------------------------------------------------------
if __name__ == "__main__":
    key = jax.random.PRNGKey(0)

    def _run_case(key, batch, input_size, output_size):
        kx, kw = jax.random.split(key)
        x = jax.random.normal(kx, (batch, input_size), dtype=jnp.float32)
        # PyTorch nn.Linear default init: U(-1/sqrt(in), 1/sqrt(in)).
        bound = float(input_size) ** -0.5
        weight = jax.random.uniform(
            kw, (output_size, input_size), jnp.float32, -bound, bound)

        y = simple_fc_forward(x, weight)
        jax.block_until_ready(y)
        assert y.shape == (batch, output_size)

        # Tight check against a bf16-input / f32-accumulate reference
        # (identical arithmetic, only summation order differs).
        y_ref_bf16 = jax.lax.dot_general(
            x.astype(jnp.bfloat16), weight.astype(jnp.bfloat16),
            dimension_numbers=(((1,), (1,)), ((), ())),
            preferred_element_type=jnp.float32)
        assert jnp.allclose(y, y_ref_bf16, atol=2e-3, rtol=2e-3), (
            batch, input_size, output_size,
            float(jnp.max(jnp.abs(y - y_ref_bf16))))

        # Loose sanity check against the full-f32 PyTorch semantics (x @ W^T).
        y_ref_f32 = x @ weight.T
        assert jnp.allclose(y, y_ref_f32, atol=5e-2, rtol=5e-2), (
            batch, input_size, output_size,
            float(jnp.max(jnp.abs(y - y_ref_f32))))

    k1, k2, k3 = jax.random.split(key, 3)
    # Tiny module-sized case (single-K fast path, full-dim N block).
    _run_case(k1, batch=8, input_size=32, output_size=16)
    # Medium case: 128-aligned N split into 2 blocks (feeds both v7x TCs).
    _run_case(k2, batch=8, input_size=512, output_size=256)
    # K-tiled case: exercises the accumulator kernel + Buffered weight stream.
    _run_case(k3, batch=16, input_size=4096, output_size=256)

    print("KERNEL_OK")
</pallas_src>

<mosaic_0001>
module attributes {stable_mosaic.version = 11 : i64} {
  func.func @_fc_kernel_single_k(%arg0: i32, %arg1: i32, %arg2: memref<8x32xbf16, #tpu.memory_space<vmem>>, %arg3: memref<16x32xbf16, #tpu.memory_space<vmem>>, %arg4: memref<8x16xf32, #tpu.memory_space<vmem>>) attributes {dimension_semantics = [#tpu.dimension_semantics<parallel>, #tpu.dimension_semantics<parallel>], iteration_bounds = array<i64: 1, 1>, scalar_prefetch = 0 : i64, scratch_operands = 0 : i64, tpu.core_type = #tpu.core_type<tc>, window_params = [{transform_indices = @transform_0, window_bounds = array<i64: 8, 32>}, {transform_indices = @transform_1, window_bounds = array<i64: 16, 32>}, {transform_indices = @transform_2, window_bounds = array<i64: 8, 16>}]} {
    %c0 = arith.constant 0 : index
    %c0_0 = arith.constant 0 : index
    %0 = vector.load %arg2[%c0, %c0_0] : memref<8x32xbf16, #tpu.memory_space<vmem>>, vector<8x32xbf16>
    %c0_1 = arith.constant 0 : index
    %c0_2 = arith.constant 0 : index
    %1 = vector.load %arg3[%c0_1, %c0_2] : memref<16x32xbf16, #tpu.memory_space<vmem>>, vector<16x32xbf16>
    %cst = arith.constant dense<0.000000e+00> : vector<8x16xf32>
    %2 = tpu.matmul %0, %1, %cst {dimension_numbers = #tpu.dot_dimension_numbers<[1], [1], [0], [0], [0, 0, 1, 0], [], []>} : vector<8x32xbf16>, vector<16x32xbf16>, vector<8x16xf32> -> vector<8x16xf32>
    %c0_3 = arith.constant 0 : index
    %c0_4 = arith.constant 0 : index
    %3 = vector.load %arg4[%c0_3, %c0_4] : memref<8x16xf32, #tpu.memory_space<vmem>>, vector<8x16xf32>
    tpu.vector_store %arg4[%c0_3, %c0_4], %2 {strides = array<i32>} : memref<8x16xf32, #tpu.memory_space<vmem>>, vector<8x16xf32>,
    return
  }
  func.func @transform_0(%arg0: i32, %arg1: i32) -> (i32, i32) {
    %c0_i32 = arith.constant 0 : i32
    %c0_i32_0 = arith.constant 0 : i32
    return %arg0, %c0_i32 : i32, i32
  }
  func.func @transform_1(%arg0: i32, %arg1: i32) -> (i32, i32) {
    %c0_i32 = arith.constant 0 : i32
    %c0_i32_0 = arith.constant 0 : i32
    return %arg1, %c0_i32 : i32, i32
  }
  func.func @transform_2(%arg0: i32, %arg1: i32) -> (i32, i32) {
    %c0_i32 = arith.constant 0 : i32
    return %arg0, %arg1 : i32, i32
  }
}

</mosaic_0001>

<llo_original>
// kernel: tpu_custom_call.1
$region0: #{tpu_custom_call.1}
  #allocation0 [shape = 'u32[]', space=smem, size = 0x4, offset = 0x4, fixed_abs, tag = 'smem constant byte address 0x4 - core index']
  #allocation1 [shape = 'u32[144,128]{1,0:T(1,128)}', space=vmem, size = 0x12000, scoped, tag = 'internal scratch']
  %s0 = inlined_call_operand.hbm [shape: bf16[8,32], index: 0, kind: input, shape index: {}]
  %s1 = inlined_call_operand.hbm [shape: bf16[16,32], index: 1, kind: input, shape index: {}]
  %s2 = inlined_call_operand.hbm [shape: f32[8,16], index: 2, kind: output, shape index: {}]
  %s3 = sld [smem:[#allocation0]]
  $region26: #{tpu_custom_call.1} parent=0
    _
  %s5 = ssub.s32 1, %s3
  %s6 = scalar_select 0, %s5, %s3
  $region1: #{tpu_custom_call.1} parent=0
    #allocation2 [shape = 'u8[2048]{0}', space=vmem, size = 0x800, scoped, tag = 'input window, operand 0, single buffered']
    #allocation3 [shape = 's32[1]{0}', space=sflag, size = 0x4, scoped, tag = 'scoped memory for tpu_custom_call.1']
    #allocation4 [shape = 's32[1]{0}', space=sflag, size = 0x4, scoped, tag = 'scoped memory for tpu_custom_call.1']
    #allocation5 [shape = 'u8[4096]{0}', space=vmem, size = 0x1000, scoped, tag = 'input window, operand 1, single buffered']
    #allocation6 [shape = 's32[1]{0}', space=sflag, size = 0x4, scoped, tag = 'scoped memory for tpu_custom_call.1']
    #allocation7 [shape = 'u8[4096]{0}', space=vmem, size = 0x1000, scoped, tag = 'output window, operand 0, single buffered']
    %7 = vsyncpa [#allocation3], 0
    %8 = vsyncpa [#allocation6], 0
    %9 = vsyncpa [#allocation4], 0
    // Predicated region
    $region2: #{tpu_custom_call.1} parent=1 // pred_check
      _
    $region3: #{tpu_custom_call.1} parent=1 // pred_check_branch
      %11 = sbr.rel (0) target = $region5
    $region4: #{tpu_custom_call.1} parent=1 // pred_region
      %s13 = ssub.s32 64, 64
      %14 = vsyncadd [#allocation3], %s13
      %s16 = sshll.u32 [#allocation2], 4
      %s17 = int_to_ptr.vmem [resolvable:$true] %s16
      %19 = dma.hbm_to_vmem [thread:$0]  %s0, 64, %s17, [#allocation3]
    $region5: #{tpu_custom_call.1} parent=1 // pred_fallthru
      _
    // Predicated region
    $region6: #{tpu_custom_call.1} parent=1 // pred_check
      _
    $region7: #{tpu_custom_call.1} parent=1 // pred_check_branch
      %21 = sbr.rel (0) target = $region9
    $region8: #{tpu_custom_call.1} parent=1 // pred_region
      %s23 = ssub.s32 128, 128
      %24 = vsyncadd [#allocation6], %s23
      %s25 = sshll.u32 [#allocation5], 4
      %s26 = int_to_ptr.vmem [resolvable:$true] %s25
      %31 = dma.hbm_to_vmem [thread:$0]  %s1, 128, %s26, [#allocation6], 64, 64, 4
    $region9: #{tpu_custom_call.1} parent=1 // pred_fallthru
      _
    // Predicated region
    $region10: #{tpu_custom_call.1} parent=1 // pred_check
      _
    $region11: #{tpu_custom_call.1} parent=1 // pred_check_branch
      %33 = sbr.rel (0) target = $region13
    $region12: #{tpu_custom_call.1} parent=1 // pred_region
      %34 = dma.done [#allocation3], 64
    $region13: #{tpu_custom_call.1} parent=1 // pred_fallthru
      _
    // Predicated region
    $region14: #{tpu_custom_call.1} parent=1 // pred_check
      _
    $region15: #{tpu_custom_call.1} parent=1 // pred_check_branch
      %36 = sbr.rel (0) target = $region17
    $region16: #{tpu_custom_call.1} parent=1 // pred_region
      %37 = dma.done [#allocation6], 128
    $region17: #{tpu_custom_call.1} parent=1 // pred_fallthru
      _
    %v39 = vld [vmem:[#allocation2] sm:$0xf]
    %v40 = vld [vmem:[#allocation5] sm:$0xf]
    %v41 = vld [vmem:[#allocation5 + $0x4] sm:$0xf]
    %v44 = vunpack.c.l.b16 %v40
    %v45 = vunpack.c.l.b16 %v41
    %v46 = vpack.c.b16 %v45, %v44
    %vm47 = vcmask 261120
    %v49 = vsel %vm47, %v39, 0
    %v52 = vsel %vm47, %v46, 0
    %54 = vmatprep.subr.bf16.mxu0 0
    %55 = vmatpush1.bf16.xpose.msra.mxu0 %v52
    %56 = vmatprep.subr.bf16.mxu0 0
    %57 = vmatpush1.bf16.xpose.msra.mxu0 0
    %58 = vmatprep.subr.bf16.mxu0 0
    %59 = vmatpush1.bf16.xpose.msra.mxu0 0
    %60 = vmatprep.subr.bf16.mxu0 0
    %61 = vmatpush1.bf16.xpose.msra.mxu0 0
    %62 = vmatprep.subr.bf16.mxu0 0
    %63 = vmatpush1.bf16.xpose.msra.mxu0 0
    %64 = vmatprep.subr.bf16.mxu0 0
    %65 = vmatpush1.bf16.xpose.msra.mxu0 0
    %66 = vmatprep.subr.bf16.mxu0 0
    %67 = vmatpush1.bf16.xpose.msra.mxu0 0
    %68 = vmatprep.subr.bf16.mxu0 0
    %69 = vmatpush1.bf16.xpose.msra.mxu0 0
    %70 = vmatprep.subr.bf16.mxu0 0
    %71 = vmatpush1.bf16.xpose.msra.mxu0 0
    %72 = vmatprep.subr.bf16.mxu0 0
    %73 = vmatpush1.bf16.xpose.msra.mxu0 0
    %74 = vmatprep.subr.bf16.mxu0 0
    %75 = vmatpush1.bf16.xpose.msra.mxu0 0
    %76 = vmatprep.subr.bf16.mxu0 0
    %77 = vmatpush1.bf16.xpose.msra.mxu0 0
    %78 = vmatprep.subr.bf16.mxu0 0
    %79 = vmatpush1.bf16.xpose.msra.mxu0 0
    %80 = vmatprep.subr.bf16.mxu0 0
    %81 = vmatpush1.bf16.xpose.msra.mxu0 0
    %82 = vmatprep.subr.bf16.mxu0 0
    %83 = vmatpush1.bf16.xpose.msra.mxu0 0
    %84 = vmatprep.subr.bf16.mxu0 0
    %85 = vmatpush1.bf16.xpose.msra.mxu0 0
    %86 = vmatprep.mubr.bf16.mxu0 0
    %87 = vmatmul.mubr.bf16.gmra.mrb[0].mxu0 %v49
    %v88 = vpop.f32.mrb[0].mxu0
    %v89 = vadd.f32 0.0, %v88
    %v90 = vpop.f32.mrb[0].mxu0
    %v91 = vpop.f32.mrb[0].mxu0
    %v92 = vpop.f32.mrb[0].mxu0
    %93 = vdwg.mxu0
    %vm94 = vcmask 130048
    %95 = vst.msk [vmem:[#allocation7] sm:$0xff] %vm94, %v89
    // Predicated region
    $region18: #{tpu_custom_call.1} parent=1 // pred_check
      _
    $region19: #{tpu_custom_call.1} parent=1 // pred_check_branch
      %97 = sbr.rel (0) target = $region21
    $region20: #{tpu_custom_call.1} parent=1 // pred_region
      %s99 = ssub.s32 128, 128
      %100 = vsyncadd [#allocation4], %s99
      %s102 = sshll.u32 [#allocation7], 4
      %s103 = int_to_ptr.vmem [resolvable:$true] %s102
      %105 = dma.vmem_to_hbm [thread:$0]  %s103, 128, %s2, [#allocation4]
    $region21: #{tpu_custom_call.1} parent=1 // pred_fallthru
      _
    // Predicated region
    $region22: #{tpu_custom_call.1} parent=1 // pred_check
      _
    $region23: #{tpu_custom_call.1} parent=1 // pred_check_branch
      %107 = sbr.rel (0) target = $region25
    $region24: #{tpu_custom_call.1} parent=1 // pred_region
      %108 = dma.done [#allocation4], 128
    $region25: #{tpu_custom_call.1} parent=1 // pred_fallthru
      _
    %109 = vsyncpa [#allocation3], 1
    %110 = vsyncpa [#allocation6], 1
    %111 = vsyncpa [#allocation4], 1

</llo_original>
